<compile_context>
chip_gen: v7x
topology: tpu7x:2x2x1
jax: 0.10.0
libtpu: 0.0.40
codegen_flags: <defaults>
</compile_context>

<pallas_src>
import jax
import jax.numpy as jnp
from jax.experimental import pallas as pl
from jax.experimental.pallas import tpu as pltpu

FP = 128  # lane-dense padded feature width used for every layer


def _round_up(x, m):
    return ((x + m - 1) // m) * m


def gcn_layer_kernel(a_ref, h_ref, w_ref, b_ref, o_ref):
    """o_tile = tanh((A_tile @ H) @ W + b) for one row tile of A_hat."""
    a = a_ref[...]                                # (TM, Np) bf16, streamed per tile
    h = h_ref[...].astype(jnp.bfloat16)           # (Np, FP) resident activations
    # Aggregation: native bf16 MXU matmul with f32 accumulation (dominant cost).
    agg = jnp.dot(a, h, preferred_element_type=jnp.float32)           # (TM, FP)
    # Per-tile feature transform (cheap: FP x FP), bf16 operands, f32 accum.
    out = jnp.dot(agg.astype(jnp.bfloat16), w_ref[...],
                  preferred_element_type=jnp.float32)                 # (TM, FP)
    out = out + b_ref[...]
    o_ref[...] = jnp.tanh(out).astype(o_ref.dtype)


def _gcn_layer(a_pad, h, w_pad, b_pad, *, tm):
    n_pad = a_pad.shape[0]
    grid = (n_pad // tm,)
    # VMEM budget: double-buffered A / output tiles + resident H / W / b
    # (the pipeline still allocates 2 buffers per input spec), plus headroom.
    est = (2 * tm * n_pad * 2          # A row tiles (bf16)
           + 2 * n_pad * FP * 4        # H (f32)
           + 2 * FP * FP * 2           # W (bf16)
           + 2 * FP * 4                # b (f32)
           + 2 * tm * FP * 4)          # output tiles (f32)
    vmem_limit = min(max(est + (4 << 20), 32 << 20), 64 << 20)
    return pl.pallas_call(
        gcn_layer_kernel,
        out_shape=jax.ShapeDtypeStruct((n_pad, FP), jnp.float32),
        grid_spec=pltpu.PrefetchScalarGridSpec(
            num_scalar_prefetch=0,
            grid=grid,
            in_specs=[
                pl.BlockSpec((tm, n_pad), lambda i: (i, 0)),   # A row tile (pipelined)
                pl.BlockSpec((n_pad, FP), lambda i: (0, 0)),   # H (resident)
                pl.BlockSpec((FP, FP), lambda i: (0, 0)),      # W (resident)
                pl.BlockSpec((1, FP), lambda i: (0, 0)),       # b (resident)
            ],
            out_specs=pl.BlockSpec((tm, FP), lambda i: (i, 0)),
        ),
        compiler_params=pltpu.CompilerParams(
            dimension_semantics=("parallel",),   # independent row tiles -> 2 TCs on v7x
            vmem_limit_bytes=vmem_limit,
        ),
    )(a_pad, h, w_pad, b_pad)


def gcn_forward(a_hat, x, params, *, row_tile=256):
    """3-layer GCN forward: h = tanh(A_hat @ h @ W_l + b_l) for l = 1..3.

    a_hat: (N, N) normalized adjacency (any float dtype; streamed as bf16).
    x:     (N, F) f32 node features.
    """
    n, f_in = x.shape
    n_out = params[-1][0].shape[1]

    tm = min(_round_up(row_tile, 8), _round_up(n, 8))
    n_pad = _round_up(n, tm)

    # Zero-pad: padded A rows/cols are zero, so padded H rows never contaminate
    # real rows; padded feature columns stay exactly zero through every layer.
    a_pad = jnp.zeros((n_pad, n_pad), jnp.bfloat16)
    a_pad = a_pad.at[:n, :n].set(a_hat.astype(jnp.bfloat16))
    h = jnp.zeros((n_pad, FP), jnp.float32).at[:n, :f_in].set(x)

    for w, b in params:
        w_pad = jnp.zeros((FP, FP), jnp.bfloat16)
        w_pad = w_pad.at[:w.shape[0], :w.shape[1]].set(w.astype(jnp.bfloat16))
        b_pad = jnp.zeros((1, FP), jnp.float32).at[0, :b.shape[0]].set(b)
        h = _gcn_layer(a_pad, h, w_pad, b_pad, tm=tm)

    return h[:n, :n_out]


def build_norm_adj(edge_index, num_nodes):
    """Dense D^{-1/2} (A + I) D^{-1/2}, PyG GCNConv normalization (plain-JAX glue)."""
    # TODO(synk): for genuinely sparse graphs, replace this dense A_hat with a
    # CSR/segment-sum gather kernel (PrefetchScalarGridSpec row pointers) to
    # avoid O(N^2) HBM traffic per layer.
    src, dst = edge_index[0], edge_index[1]
    a = jnp.zeros((num_nodes, num_nodes), jnp.float32)
    a = a.at[dst, src].add(1.0)                              # message flows src -> dst
    a = a + jnp.eye(num_nodes, dtype=jnp.float32)            # self-loops
    deg = a.sum(axis=1)
    dinv = jax.lax.rsqrt(deg)
    return a * dinv[:, None] * dinv[None, :]


def glorot(key, shape):
    fan_in, fan_out = shape
    limit = jnp.sqrt(6.0 / (fan_in + fan_out))
    return jax.random.uniform(key, shape, jnp.float32, -limit, limit)


def init_params(key, num_features, num_outputs):
    k1, k2, k3 = jax.random.split(key, 3)
    w1 = glorot(k1, (num_features, 32)); b1 = jnp.zeros((32,), jnp.float32)
    w2 = glorot(k2, (32, 16));           b2 = jnp.zeros((16,), jnp.float32)
    w3 = glorot(k3, (16, num_outputs));  b3 = jnp.zeros((num_outputs,), jnp.float32)
    return ((w1, b1), (w2, b2), (w3, b3))


def gcn_forward_ref(a_hat, x, params):
    """Plain-JAX reference mirroring the kernel's bf16 operand rounding."""
    def bf(v):
        return v.astype(jnp.bfloat16).astype(jnp.float32)
    a = a_hat.astype(jnp.float32)
    h = x
    hp = jax.lax.Precision.HIGHEST
    for w, b in params:
        agg = jnp.dot(a, bf(h), precision=hp)
        h = jnp.tanh(jnp.dot(bf(agg), bf(w), precision=hp) + b[None, :])
    return h


if __name__ == "__main__":
    num_nodes = 48
    num_features = 4
    num_outputs = 2

    key = jax.random.PRNGKey(0)
    k_x, k_p = jax.random.split(key)

    # node features
    x = jax.random.normal(k_x, (num_nodes, num_features), jnp.float32)

    # simple undirected ring graph, both directions listed, shape (2, E)
    fwd = jnp.stack([jnp.arange(num_nodes), (jnp.arange(num_nodes) + 1) % num_nodes])
    edge_index = jnp.concatenate([fwd, fwd[::-1]], axis=1).astype(jnp.int32)

    a_hat = build_norm_adj(edge_index, num_nodes).astype(jnp.bfloat16)
    params = init_params(k_p, num_features, num_outputs)

    # row_tile=16 so the demo exercises a real multi-step grid (48/16 = 3 tiles).
    out = gcn_forward(a_hat, x, params, row_tile=16)
    out = jax.block_until_ready(out)

    ref = gcn_forward_ref(a_hat, x, params)
    assert out.shape == (num_nodes, num_outputs)
    assert jnp.allclose(out, ref, atol=1e-4, rtol=1e-4), float(jnp.max(jnp.abs(out - ref)))

    print("KERNEL_OK")
</pallas_src>

<mosaic_0001>
module attributes {stable_mosaic.version = 11 : i64} {
  func.func @gcn_layer_kernel(%arg0: i32, %arg1: memref<16x48xbf16, #tpu.memory_space<vmem>>, %arg2: memref<48x128xf32, #tpu.memory_space<vmem>>, %arg3: memref<128x128xbf16, #tpu.memory_space<vmem>>, %arg4: memref<1x128xf32, #tpu.memory_space<vmem>>, %arg5: memref<16x128xf32, #tpu.memory_space<vmem>>) attributes {dimension_semantics = [#tpu.dimension_semantics<parallel>], iteration_bounds = array<i64: 3>, scalar_prefetch = 0 : i64, scratch_operands = 0 : i64, tpu.core_type = #tpu.core_type<tc>, window_params = [{transform_indices = @transform_0, window_bounds = array<i64: 16, 48>}, {pipeline_mode = #tpu.pipeline_mode<synchronous>, transform_indices = @transform_1, window_bounds = array<i64: 48, 128>}, {pipeline_mode = #tpu.pipeline_mode<synchronous>, transform_indices = @transform_2, window_bounds = array<i64: 128, 128>}, {pipeline_mode = #tpu.pipeline_mode<synchronous>, transform_indices = @transform_3, window_bounds = array<i64: 1, 128>}, {transform_indices = @transform_4, window_bounds = array<i64: 16, 128>}]} {
    %c0 = arith.constant 0 : index
    %c0_0 = arith.constant 0 : index
    %0 = vector.load %arg1[%c0, %c0_0] : memref<16x48xbf16, #tpu.memory_space<vmem>>, vector<16x48xbf16>
    %c0_1 = arith.constant 0 : index
    %c0_2 = arith.constant 0 : index
    %1 = vector.load %arg2[%c0_1, %c0_2] : memref<48x128xf32, #tpu.memory_space<vmem>>, vector<48x128xf32>
    %2 = arith.truncf %1 : vector<48x128xf32> to vector<48x128xbf16>
    %cst = arith.constant dense<0.000000e+00> : vector<16x128xf32>
    %3 = tpu.matmul %0, %2, %cst {dimension_numbers = #tpu.dot_dimension_numbers<[1], [0], [0], [1], [0, 0, 1, 1], [], []>} : vector<16x48xbf16>, vector<48x128xbf16>, vector<16x128xf32> -> vector<16x128xf32>
    %4 = arith.truncf %3 : vector<16x128xf32> to vector<16x128xbf16>
    %c0_3 = arith.constant 0 : index
    %c0_4 = arith.constant 0 : index
    %5 = vector.load %arg3[%c0_3, %c0_4] : memref<128x128xbf16, #tpu.memory_space<vmem>>, vector<128x128xbf16>
    %cst_5 = arith.constant dense<0.000000e+00> : vector<16x128xf32>
    %6 = tpu.matmul %4, %5, %cst_5 {dimension_numbers = #tpu.dot_dimension_numbers<[1], [0], [0], [1], [0, 0, 1, 1], [], []>} : vector<16x128xbf16>, vector<128x128xbf16>, vector<16x128xf32> -> vector<16x128xf32>
    %c0_6 = arith.constant 0 : index
    %c0_7 = arith.constant 0 : index
    %7 = vector.load %arg4[%c0_6, %c0_7] : memref<1x128xf32, #tpu.memory_space<vmem>>, vector<1x128xf32>
    %8 = vector.broadcast %7 : vector<1x128xf32> to vector<16x128xf32>
    %9 = arith.addf %6, %8 : vector<16x128xf32>
    %10 = math.tanh %9 : vector<16x128xf32>
    %c0_8 = arith.constant 0 : index
    %c0_9 = arith.constant 0 : index
    %11 = vector.load %arg5[%c0_8, %c0_9] : memref<16x128xf32, #tpu.memory_space<vmem>>, vector<16x128xf32>
    tpu.vector_store %arg5[%c0_8, %c0_9], %10 {strides = array<i32>} : memref<16x128xf32, #tpu.memory_space<vmem>>, vector<16x128xf32>,
    return
  }
  func.func @transform_0(%arg0: i32) -> (i32, i32) {
    %c0_i32 = arith.constant 0 : i32
    %c0_i32_0 = arith.constant 0 : i32
    return %arg0, %c0_i32 : i32, i32
  }
  func.func @transform_1(%arg0: i32) -> (i32, i32) {
    %c0_i32 = arith.constant 0 : i32
    %c0_i32_0 = arith.constant 0 : i32
    %c0_i32_1 = arith.constant 0 : i32
    return %c0_i32, %c0_i32_0 : i32, i32
  }
  func.func @transform_2(%arg0: i32) -> (i32, i32) {
    %c0_i32 = arith.constant 0 : i32
    %c0_i32_0 = arith.constant 0 : i32
    %c0_i32_1 = arith.constant 0 : i32
    return %c0_i32, %c0_i32_0 : i32, i32
  }
  func.func @transform_3(%arg0: i32) -> (i32, i32) {
    %c0_i32 = arith.constant 0 : i32
    %c0_i32_0 = arith.constant 0 : i32
    %c0_i32_1 = arith.constant 0 : i32
    return %c0_i32, %c0_i32_0 : i32, i32
  }
  func.func @transform_4(%arg0: i32) -> (i32, i32) {
    %c0_i32 = arith.constant 0 : i32
    %c0_i32_0 = arith.constant 0 : i32
    return %arg0, %c0_i32 : i32, i32
  }
}

</mosaic_0001>

<llo_original>
// kernel: tpu_custom_call.1
$region0: #{tpu_custom_call.1}
  #allocation0 [shape = 'u32[]', space=smem, size = 0x4, offset = 0x4, fixed_abs, tag = 'smem constant byte address 0x4 - core index']
  #allocation1 [shape = 'u32[144,128]{1,0:T(1,128)}', space=vmem, size = 0x12000, scoped, tag = 'internal scratch']
  %s0 = inlined_call_operand.hbm [shape: bf16[48,48], index: 0, kind: input, shape index: {}]
  %s1 = inlined_call_operand.hbm [shape: f32[48,128], index: 1, kind: input, shape index: {}]
  %s2 = inlined_call_operand.hbm [shape: bf16[128,128], index: 2, kind: input, shape index: {}]
  %s3 = inlined_call_operand.vmem [shape: f32[1,128], index: 3, kind: input, shape index: {}]
  %s4 = inlined_call_operand.hbm [shape: f32[48,128], index: 4, kind: output, shape index: {}]
  %s5 = sld [smem:[#allocation0]]
  $region61: #{tpu_custom_call.1} parent=0
    _
  %s7 = ssub.s32 1, %s5
  %s8 = scalar_select 0, %s7, %s5
  $region1: #{tpu_custom_call.1} parent=0
    #allocation2 [shape = 'u8[8192]{0}', space=vmem, size = 0x2000, scoped, tag = 'input window, operand 0']
    #allocation3 [shape = 's32[2]{0}', space=sflag, size = 0x8, scoped, tag = 'scoped memory for tpu_custom_call.1']
    #allocation4 [shape = 's32[2]{0}', space=sflag, size = 0x8, scoped, tag = 'scoped memory for tpu_custom_call.1']
    #allocation5 [shape = 'u8[24576]{0}', space=vmem, size = 0x6000, scoped, tag = 'input window, operand 1, single buffered']
    #allocation6 [shape = 's32[1]{0}', space=sflag, size = 0x4, scoped, tag = 'scoped memory for tpu_custom_call.1']
    #allocation7 [shape = 'u8[32768]{0}', space=vmem, size = 0x8000, scoped, tag = 'input window, operand 2, single buffered']
    #allocation8 [shape = 'u8[16384]{0}', space=vmem, size = 0x4000, scoped, tag = 'output window, operand 0']
    %9 = vsyncpa [#allocation3], 0
    %s10 = scalar_lea.sflag [#allocation3], 1
    %11 = vsyncpa %s10, 0
    %12 = vsyncpa [#allocation6], 0
    %13 = vsyncpa [#allocation4], 0
    %s14 = scalar_lea.sflag [#allocation4], 1
    %15 = vsyncpa %s14, 0
    loop: start=0, step=1, limit=5
    $region2: #{tpu_custom_call.1} parent=1 // loop_pre_header
      _
    $region3: #{tpu_custom_call.1} parent=1 // loop_header
      %s17 = sphi 0, %s21
      %p18 = scmp.ge.s32.totalorder %s17, 5
      %s27 = sphi 0, %s29
      %s30 = sphi 0, %s27
      %s31 = sphi 0, %s30
      %s47 = sphi 0, %s31
      %s51 = sphi 0, %s51
      %s53 = sphi 0, %s51
      %s54 = sphi 0, %s53
      %s68 = sphi 0, %s54
      %s72 = sphi 0, %s72
      %s74 = sphi 0, %s72
      %s75 = sphi 0, %s74
      %s89 = sphi 0, %s75
      %s93 = sphi 0, %s93
      %s95 = sphi 0, %s93
      %s96 = sphi 0, %s95
      %s110 = sphi 0, %s96
      %s116 = sphi 0, %s118
      %s119 = sphi 0, %s116
      %s120 = sphi 0, %s119
      %s136 = sphi 0, %s120
    $region4: #{tpu_custom_call.1} parent=1 // loop_header_branch
      %20 = sbr.rel (%p18) target = $region8
    $region5: #{tpu_custom_call.1} parent=1 // loop_body
      %s22 = ssub.s32 %s17, 1
      %s23 = ssub.s32 %s17, 2
      %s24 = sadd.s32 %s17, 1
      %s25 = ssub.s32 %s17, %s24
      %p26 = scmp.eq.s32.totalorder %s25, 0
      %s28 = sadd.s32 %s27, 1
      %s29 = scalar_select %p26, %s27, %s28
      %p32 = pneg %p26
      %p33 = scmp.eq.s32.totalorder %s17, 2
      %p34 = por %p32, %p33
      %p35 = scmp.ne.s32.totalorder %s27, %s30
      %p36 = scmp.eq.s32.totalorder %s17, 0
      %p37 = por %p35, %p36
      %p38 = scmp.ne.s32.totalorder %s27, %s30
      %p39 = scmp.eq.s32.totalorder %s22, 2
      %p40 = por %p38, %p39
      %p41 = scmp.ne.s32.totalorder %s30, %s31
      %p42 = scmp.eq.s32.totalorder %s22, 0
      %p43 = por %p41, %p42
      %p44 = scmp.ne.s32.totalorder %s30, %s31
      %p45 = scmp.eq.s32.totalorder %s23, 2
      %p46 = por %p44, %p45
      %p48 = scmp.ne.s32.totalorder %s31, %s47
      %p49 = scmp.eq.s32.totalorder %s23, 0
      %p50 = por %p48, %p49
      %s52 = sadd.s32 %s51, 1
      %p55 = scmp.eq.s32.totalorder %s17, 2
      %p56 = scmp.ne.s32.totalorder %s51, %s53
      %p57 = scmp.eq.s32.totalorder %s17, 0
      %p58 = por %p56, %p57
      %p59 = scmp.ne.s32.totalorder %s51, %s53
      %p60 = scmp.eq.s32.totalorder %s22, 2
      %p61 = por %p59, %p60
      %p62 = scmp.ne.s32.totalorder %s53, %s54
      %p63 = scmp.eq.s32.totalorder %s22, 0
      %p64 = por %p62, %p63
      %p65 = scmp.ne.s32.totalorder %s53, %s54
      %p66 = scmp.eq.s32.totalorder %s23, 2
      %p67 = por %p65, %p66
      %p69 = scmp.ne.s32.totalorder %s54, %s68
      %p70 = scmp.eq.s32.totalorder %s23, 0
      %p71 = por %p69, %p70
      %s73 = sadd.s32 %s72, 1
      %p76 = scmp.eq.s32.totalorder %s17, 2
      %p77 = scmp.ne.s32.totalorder %s72, %s74
      %p78 = scmp.eq.s32.totalorder %s17, 0
      %p79 = por %p77, %p78
      %p80 = scmp.ne.s32.totalorder %s72, %s74
      %p81 = scmp.eq.s32.totalorder %s22, 2
      %p82 = por %p80, %p81
      %p83 = scmp.ne.s32.totalorder %s74, %s75
      %p84 = scmp.eq.s32.totalorder %s22, 0
      %p85 = por %p83, %p84
      %p86 = scmp.ne.s32.totalorder %s74, %s75
      %p87 = scmp.eq.s32.totalorder %s23, 2
      %p88 = por %p86, %p87
      %p90 = scmp.ne.s32.totalorder %s75, %s89
      %p91 = scmp.eq.s32.totalorder %s23, 0
      %p92 = por %p90, %p91
      %s94 = sadd.s32 %s93, 1
      %p97 = scmp.eq.s32.totalorder %s17, 2
      %p98 = scmp.ne.s32.totalorder %s93, %s95
      %p99 = scmp.eq.s32.totalorder %s17, 0
      %p100 = por %p98, %p99
      %p101 = scmp.ne.s32.totalorder %s93, %s95
      %p102 = scmp.eq.s32.totalorder %s22, 2
      %p103 = por %p101, %p102
      %p104 = scmp.ne.s32.totalorder %s95, %s96
      %p105 = scmp.eq.s32.totalorder %s22, 0
      %p106 = por %p104, %p105
      %p107 = scmp.ne.s32.totalorder %s95, %s96
      %p108 = scmp.eq.s32.totalorder %s23, 2
      %p109 = por %p107, %p108
      %p111 = scmp.ne.s32.totalorder %s96, %s110
      %p112 = scmp.eq.s32.totalorder %s23, 0
      %p113 = por %p111, %p112
      %s114 = ssub.s32 %s17, %s24
      %p115 = scmp.eq.s32.totalorder %s114, 0
      %s117 = sadd.s32 %s116, 1
      %s118 = scalar_select %p115, %s116, %s117
      %p121 = pneg %p115
      %p122 = scmp.eq.s32.totalorder %s17, 2
      %p123 = por %p121, %p122
      %p124 = scmp.ne.s32.totalorder %s116, %s119
      %p125 = scmp.eq.s32.totalorder %s17, 0
      %p126 = por %p124, %p125
      %p127 = scmp.ne.s32.totalorder %s116, %s119
      %p128 = scmp.eq.s32.totalorder %s22, 2
      %p129 = por %p127, %p128
      %p130 = scmp.ne.s32.totalorder %s119, %s120
      %p131 = scmp.eq.s32.totalorder %s22, 0
      %p132 = por %p130, %p131
      %p133 = scmp.ne.s32.totalorder %s119, %s120
      %p134 = scmp.eq.s32.totalorder %s23, 2
      %p135 = por %p133, %p134
      %p137 = scmp.ne.s32.totalorder %s120, %s136
      %p138 = scmp.eq.s32.totalorder %s23, 0
      %p139 = por %p137, %p138
      %p140 = scmp.le.s32.totalorder 1, %s17
      %p141 = scmp.lt.s32.totalorder %s17, 4
      %p142 = pnand %p140, %p141
      %p143 = pneg %p142
      // Predicated region
      $region9: #{tpu_custom_call.1} parent=5 // pred_check
        _
      $region10: #{tpu_custom_call.1} parent=5 // pred_check_branch
        %145 = sbr.rel (%p142) target = $region12
      $region11: #{tpu_custom_call.1} parent=5 // pred_region
        %s146 = ssub.s32 %s17, 1
        // Predicated region
        $region13: #{tpu_custom_call.1} parent=11 // pred_check
          %p147 = pneg %p64
        $region14: #{tpu_custom_call.1} parent=11 // pred_check_branch
          %149 = sbr.rel (%p147) target = $region16
        $region15: #{tpu_custom_call.1} parent=11 // pred_region
          %s151 = ssub.s32 768, 768
          %152 = vsyncadd [#allocation6], %s151
          %s153 = sshll.u32 [#allocation5], 4
          %s154 = int_to_ptr.vmem [resolvable:$true] %s153
          %159 = dma.hbm_to_vmem [thread:$0]  %s1, 768, %s154, [#allocation6], 128, 128, 8
        $region16: #{tpu_custom_call.1} parent=11 // pred_fallthru
          _
        // Predicated region
        $region17: #{tpu_custom_call.1} parent=11 // pred_check
          %p160 = pneg %p85
        $region18: #{tpu_custom_call.1} parent=11 // pred_check_branch
          %162 = sbr.rel (%p160) target = $region20
        $region19: #{tpu_custom_call.1} parent=11 // pred_region
          %s164 = ssub.s32 1024, 1024
          %165 = vsyncadd [#allocation6], %s164
          %s166 = sshll.u32 [#allocation7], 4
          %s167 = int_to_ptr.vmem [resolvable:$true] %s166
          %172 = dma.hbm_to_vmem [thread:$0]  %s2, 1024, %s167, [#allocation6], 64, 64, 4
        $region20: #{tpu_custom_call.1} parent=11 // pred_fallthru
          _
        // Predicated region
        $region21: #{tpu_custom_call.1} parent=11 // pred_check
          %p173 = pneg %p106
        $region22: #{tpu_custom_call.1} parent=11 // pred_check_branch
          %175 = sbr.rel (%p173) target = $region24
        $region23: #{tpu_custom_call.1} parent=11 // pred_region
          _
        $region24: #{tpu_custom_call.1} parent=11 // pred_fallthru
          _
      $region12: #{tpu_custom_call.1} parent=5 // pred_fallthru
        _
      %p176 = scmp.lt.s32.totalorder %s17, 3
      // Predicated region
      $region25: #{tpu_custom_call.1} parent=5 // pred_check
        %p177 = pneg %p176
      $region26: #{tpu_custom_call.1} parent=5 // pred_check_branch
        %179 = sbr.rel (%p177) target = $region28
      $region27: #{tpu_custom_call.1} parent=5 // pred_region
        // Predicated region
        $region29: #{tpu_custom_call.1} parent=27 // pred_check
          %p180 = pneg %p37
        $region30: #{tpu_custom_call.1} parent=27 // pred_check_branch
          %182 = sbr.rel (%p180) target = $region32
        $region31: #{tpu_custom_call.1} parent=27 // pred_region
          %s183 = sand.u32 %s27, 1
          %s184 = scalar_lea.sflag [#allocation3], %s183
          %s185 = sand.u32 %s27, 1
          %s186 = smul.addr %s185, 8
          %s187 = scalar_lea.vmem [#allocation2], %s186
          %s188 = smul.u32 2, %s17
          %s190 = ssub.s32 128, 128
          %191 = vsyncadd %s184, %s190
          %s192 = smul.addr %s188, 64
          %s193 = scalar_lea.hbm %s0, %s192
          %s194 = sshll.u32 %s187, 4
          %s195 = int_to_ptr.vmem [resolvable:$true] %s194
          %200 = dma.hbm_to_vmem [thread:$0]  %s193, 128, %s195, %s184, 64, 64, 4
        $region32: #{tpu_custom_call.1} parent=27 // pred_fallthru
          _
      $region28: #{tpu_custom_call.1} parent=5 // pred_fallthru
        _
      %p201 = scmp.le.s32.totalorder 1, %s17
      %p202 = scmp.lt.s32.totalorder %s17, 4
      %p203 = pnand %p201, %p202
      %p204 = pneg %p203
      // Predicated region
      $region33: #{tpu_custom_call.1} parent=5 // pred_check
        _
      $region34: #{tpu_custom_call.1} parent=5 // pred_check_branch
        %206 = sbr.rel (%p203) target = $region36
      $region35: #{tpu_custom_call.1} parent=5 // pred_region
        %s207 = ssub.s32 %s17, 1
        %s208 = sand.u32 %s30, 1
        %s209 = scalar_lea.sflag [#allocation3], %s208
        %s210 = sand.u32 %s30, 1
        %s211 = smul.addr %s210, 8
        %s212 = scalar_lea.vmem [#allocation2], %s211
        // Predicated region
        $region37: #{tpu_custom_call.1} parent=35 // pred_check
          %p213 = pneg %p43
        $region38: #{tpu_custom_call.1} parent=35 // pred_check_branch
          %215 = sbr.rel (%p213) target = $region40
        $region39: #{tpu_custom_call.1} parent=35 // pred_region
          %216 = dma.done %s209, 128
        $region40: #{tpu_custom_call.1} parent=35 // pred_fallthru
          _
        // Predicated region
        $region41: #{tpu_custom_call.1} parent=35 // pred_check
          %p217 = pneg %p64
        $region42: #{tpu_custom_call.1} parent=35 // pred_check_branch
          %219 = sbr.rel (%p217) target = $region44
        $region43: #{tpu_custom_call.1} parent=35 // pred_region
          %220 = dma.done [#allocation6], 768
        $region44: #{tpu_custom_call.1} parent=35 // pred_fallthru
          _
        // Predicated region
        $region45: #{tpu_custom_call.1} parent=35 // pred_check
          %p221 = pneg %p85
        $region46: #{tpu_custom_call.1} parent=35 // pred_check_branch
          %223 = sbr.rel (%p221) target = $region48
        $region47: #{tpu_custom_call.1} parent=35 // pred_region
          %224 = dma.done [#allocation6], 1024
        $region48: #{tpu_custom_call.1} parent=35 // pred_fallthru
          _
        %s225 = sand.u32 %s30, 1
        %s226 = scalar_lea.sflag [#allocation3], %s225
        %s227 = sand.u32 %s30, 1
        %s228 = smul.addr %s227, 8
        %s229 = scalar_lea.vmem [#allocation2], %s228
        %p230 = pneg %p43
        %p231 = pneg %p40
        %p232 = pneg %p64
        %p233 = pneg %p61
        %p234 = pneg %p85
        %p235 = pneg %p82
        %p236 = pneg %p106
        %p237 = pneg %p103
        %p238 = pneg %p132
        %p239 = pneg %p129
        %s240 = sand.u32 %s119, 1
        %s241 = scalar_lea.sflag [#allocation4], %s240
        %s242 = sand.u32 %s119, 1
        %s243 = smul.addr %s242, 16
        %s244 = scalar_lea.vmem [#allocation8], %s243
        %s245 = smul.u32 2, %s22
        %s246 = smul.u32 2, %s22
        %v248 = vld [vmem:[%s212] sm:$0xf]
        %v249 = vld [vmem:[%s212 + $0x4] sm:$0xf]
        %v250 = vld [vmem:[#allocation5] sm:$0xff]
        %v251 = vld [vmem:[#allocation5 + $0x8] sm:$0xff]
        %v252 = vld [vmem:[#allocation5 + $0x10] sm:$0xff]
        %v253 = vld [vmem:[#allocation5 + $0x18] sm:$0xff]
        %v254 = vld [vmem:[#allocation5 + $0x20] sm:$0xff]
        %v255 = vld [vmem:[#allocation5 + $0x28] sm:$0xff]
        %v256 = vpack.c.bf16 %v251, %v250
        %v257 = vpack.c.bf16 %v253, %v252
        %v258 = vpack.c.bf16 %v255, %v254
        %v261 = vunpack.c.l.b16 %v248
        %v262 = vunpack.c.l.b16 %v249
        %v263 = vpack.c.b16 %v262, %v261
        %vm264 = vcmask 392192
        %v266 = vsel %vm264, %v263, 0
        %268 = vmatprep.subr.bf16.mxu0 0
        %269 = vmatpush1.bf16.msra.mxu0 %v256
        %270 = vmatprep.subr.bf16.mxu0 0
        %271 = vmatpush1.bf16.msra.mxu0 %v257
        %272 = vmatprep.subr.bf16.mxu0 0
        %273 = vmatpush1.bf16.msra.mxu0 %v258
        %274 = vmatprep.subr.bf16.mxu0 0
        %275 = vmatpush1.bf16.msra.mxu0 0
        %276 = vmatprep.subr.bf16.mxu0 0
        %277 = vmatpush1.bf16.msra.mxu0 0
        %278 = vmatprep.subr.bf16.mxu0 0
        %279 = vmatpush1.bf16.msra.mxu0 0
        %280 = vmatprep.subr.bf16.mxu0 0
        %281 = vmatpush1.bf16.msra.mxu0 0
        %282 = vmatprep.subr.bf16.mxu0 0
        %283 = vmatpush1.bf16.msra.mxu0 0
        %284 = vmatprep.subr.bf16.mxu0 0
        %285 = vmatpush1.bf16.msra.mxu0 0
        %286 = vmatprep.subr.bf16.mxu0 0
        %287 = vmatpush1.bf16.msra.mxu0 0
        %288 = vmatprep.subr.bf16.mxu0 0
        %289 = vmatpush1.bf16.msra.mxu0 0
        %290 = vmatprep.subr.bf16.mxu0 0
        %291 = vmatpush1.bf16.msra.mxu0 0
        %292 = vmatprep.subr.bf16.mxu0 0
        %293 = vmatpush1.bf16.msra.mxu0 0
        %294 = vmatprep.subr.bf16.mxu0 0
        %295 = vmatpush1.bf16.msra.mxu0 0
        %296 = vmatprep.subr.bf16.mxu0 0
        %297 = vmatpush1.bf16.msra.mxu0 0
        %298 = vmatprep.subr.bf16.mxu0 0
        %299 = vmatpush1.bf16.msra.mxu0 0
        %300 = vmatprep.mubr.bf16.mxu0 0
        %301 = vmatmul.mubr.bf16.gmra.mrb[0].mxu0 %v266
        %v302 = vpop.f32.mrb[0].mxu0
        %v303 = vadd.f32 0.0, %v302
        %v304 = vpop.f32.mrb[0].mxu0
        %v305 = vpop.f32.mrb[0].mxu0
        %v306 = vadd.f32 0.0, %v305
        %v307 = vpop.f32.mrb[0].mxu0
        %308 = vdwg.mxu0
        %v309 = vpack.c.bf16 %v306, %v303
        %v310 = vld [vmem:[#allocation7] sm:$0xf]
        %v311 = vld [vmem:[#allocation7 + $0x4] sm:$0xf]
        %v312 = vld [vmem:[#allocation7 + $0x8] sm:$0xf]
        %v313 = vld [vmem:[#allocation7 + $0xc] sm:$0xf]
        %v314 = vld [vmem:[#allocation7 + $0x10] sm:$0xf]
        %v315 = vld [vmem:[#allocation7 + $0x14] sm:$0xf]
        %v316 = vld [vmem:[#allocation7 + $0x18] sm:$0xf]
        %v317 = vld [vmem:[#allocation7 + $0x1c] sm:$0xf]
        %v318 = vld [vmem:[#allocation7 + $0x20] sm:$0xf]
        %v319 = vld [vmem:[#allocation7 + $0x24] sm:$0xf]
        %v320 = vld [vmem:[#allocation7 + $0x28] sm:$0xf]
        %v321 = vld [vmem:[#allocation7 + $0x2c] sm:$0xf]
        %v322 = vld [vmem:[#allocation7 + $0x30] sm:$0xf]
        %v323 = vld [vmem:[#allocation7 + $0x34] sm:$0xf]
        %v324 = vld [vmem:[#allocation7 + $0x38] sm:$0xf]
        %v325 = vld [vmem:[#allocation7 + $0x3c] sm:$0xf]
        %v326 = vld [vmem:[%s3] sm:$0x1]
        %v328 = vlaneseq
        %v329 = vshrl.u32 %v328, 7
        %v330 = vsub.s32 0, %v329
        %v331 = vrot.slane %v326, %v330
        %v349 = vunpack.c.l.b16 %v310
        %v350 = vunpack.c.l.b16 %v311
        %v351 = vunpack.c.l.b16 %v312
        %v352 = vunpack.c.l.b16 %v313
        %v353 = vunpack.c.l.b16 %v314
        %v354 = vunpack.c.l.b16 %v315
        %v355 = vunpack.c.l.b16 %v316
        %v356 = vunpack.c.l.b16 %v317
        %v357 = vunpack.c.l.b16 %v318
        %v358 = vunpack.c.l.b16 %v319
        %v359 = vunpack.c.l.b16 %v320
        %v360 = vunpack.c.l.b16 %v321
        %v361 = vunpack.c.l.b16 %v322
        %v362 = vunpack.c.l.b16 %v323
        %v363 = vunpack.c.l.b16 %v324
        %v364 = vunpack.c.l.b16 %v325
        %v365 = vpack.c.b16 %v350, %v349
        %v366 = vpack.c.b16 %v352, %v351
        %v367 = vpack.c.b16 %v354, %v353
        %v368 = vpack.c.b16 %v356, %v355
        %v369 = vpack.c.b16 %v358, %v357
        %v370 = vpack.c.b16 %v360, %v359
        %v371 = vpack.c.b16 %v362, %v361
        %v372 = vpack.c.b16 %v364, %v363
        %381 = vmatprep.subr.bf16.mxu0 0
        %382 = vmatpush1.bf16.msra.mxu0 %v365
        %383 = vmatprep.subr.bf16.mxu0 0
        %384 = vmatpush1.bf16.msra.mxu0 %v366
        %385 = vmatprep.subr.bf16.mxu0 0
        %386 = vmatpush1.bf16.msra.mxu0 %v367
        %387 = vmatprep.subr.bf16.mxu0 0
        %388 = vmatpush1.bf16.msra.mxu0 %v368
        %389 = vmatprep.subr.bf16.mxu0 0
        %390 = vmatpush1.bf16.msra.mxu0 %v369
        %391 = vmatprep.subr.bf16.mxu0 0
        %392 = vmatpush1.bf16.msra.mxu0 %v370
        %393 = vmatprep.subr.bf16.mxu0 0
        %394 = vmatpush1.bf16.msra.mxu0 %v371
        %395 = vmatprep.subr.bf16.mxu0 0
        %396 = vmatpush1.bf16.msra.mxu0 %v372
        %397 = vmatprep.subr.bf16.mxu0 0
        %398 = vmatpush1.bf16.msra.mxu0 0
        %399 = vmatprep.subr.bf16.mxu0 0
        %400 = vmatpush1.bf16.msra.mxu0 0
        %401 = vmatprep.subr.bf16.mxu0 0
        %402 = vmatpush1.bf16.msra.mxu0 0
        %403 = vmatprep.subr.bf16.mxu0 0
        %404 = vmatpush1.bf16.msra.mxu0 0
        %405 = vmatprep.subr.bf16.mxu0 0
        %406 = vmatpush1.bf16.msra.mxu0 0
        %407 = vmatprep.subr.bf16.mxu0 0
        %408 = vmatpush1.bf16.msra.mxu0 0
        %409 = vmatprep.subr.bf16.mxu0 0
        %410 = vmatpush1.bf16.msra.mxu0 0
        %411 = vmatprep.subr.bf16.mxu0 0
        %412 = vmatpush1.bf16.msra.mxu0 0
        %413 = vmatprep.mubr.bf16.mxu0 0
        %414 = vmatmul.mubr.bf16.gmra.mrb[0].mxu0 %v309
        %v415 = vpop.f32.mrb[0].mxu0
        %v416 = vadd.f32 %v331, %v415
        %v417 = vpop.f32.mrb[0].mxu0
        %v418 = vpop.f32.mrb[0].mxu0
        %v419 = vadd.f32 %v331, %v418
        %v420 = vpop.f32.mrb[0].mxu0
        %421 = vdwg.mxu0
        %v422 = vtanh.pop %v416
        %v423 = vtanh.pop %v419
        %424 = vst [vmem:[%s244] sm:$0xff] %v422
        %425 = vst [vmem:[%s244 + $0x8] sm:$0xff] %v423
        %s426 = sand.u32 %s119, 1
        %s427 = scalar_lea.sflag [#allocation4], %s426
        %s428 = sand.u32 %s119, 1
        %s429 = smul.addr %s428, 16
        %s430 = scalar_lea.vmem [#allocation8], %s429
        // Predicated region
        $region49: #{tpu_custom_call.1} parent=35 // pred_check
          %p431 = pneg %p129
        $region50: #{tpu_custom_call.1} parent=35 // pred_check_branch
          %433 = sbr.rel (%p431) target = $region52
        $region51: #{tpu_custom_call.1} parent=35 // pred_region
          %s434 = smul.u32 2, %s22
          %s436 = ssub.s32 256, 256
          %437 = vsyncadd %s427, %s436
          %s438 = smul.addr %s434, 128
          %s439 = scalar_lea.hbm %s4, %s438
          %s440 = sshll.u32 %s430, 4
          %s441 = int_to_ptr.vmem [resolvable:$true] %s440
          %446 = dma.vmem_to_hbm [thread:$0]  %s441, 256, %s439, %s427, 128, 128, 8
        $region52: #{tpu_custom_call.1} parent=35 // pred_fallthru
          _
      $region36: #{tpu_custom_call.1} parent=5 // pred_fallthru
        _
      %p447 = scmp.le.s32.totalorder 2, %s17
      // Predicated region
      $region53: #{tpu_custom_call.1} parent=5 // pred_check
        %p448 = pneg %p447
      $region54: #{tpu_custom_call.1} parent=5 // pred_check_branch
        %450 = sbr.rel (%p448) target = $region56
      $region55: #{tpu_custom_call.1} parent=5 // pred_region
        %s451 = ssub.s32 %s17, 2
        // Predicated region
        $region57: #{tpu_custom_call.1} parent=55 // pred_check
          %p452 = pneg %p135
        $region58: #{tpu_custom_call.1} parent=55 // pred_check_branch
          %454 = sbr.rel (%p452) target = $region60
        $region59: #{tpu_custom_call.1} parent=55 // pred_region
          %s455 = sand.u32 %s120, 1
          %s456 = scalar_lea.sflag [#allocation4], %s455
          %s457 = sand.u32 %s120, 1
          %s458 = smul.addr %s457, 16
          %s459 = scalar_lea.vmem [#allocation8], %s458
          %460 = dma.done %s456, 256
        $region60: #{tpu_custom_call.1} parent=55 // pred_fallthru
          _
      $region56: #{tpu_custom_call.1} parent=5 // pred_fallthru
        _
    $region6: #{tpu_custom_call.1} parent=1 // loop_footer
      %s21 = sadd.s32 1, %s17
    $region7: #{tpu_custom_call.1} parent=1 // loop_footer_branch
      %16 = sbr.rel target = $region3
    $region8: #{tpu_custom_call.1} parent=1 // loop_exit
      _
    %461 = vsyncpa [#allocation3], 1
    %s462 = scalar_lea.sflag [#allocation3], 1
    %463 = vsyncpa %s462, 1
    %464 = vsyncpa [#allocation6], 1
    %465 = vsyncpa [#allocation4], 1
    %s466 = scalar_lea.sflag [#allocation4], 1
    %467 = vsyncpa %s466, 1

</llo_original>
